<compile_context>
chip_gen: v7x
topology: tpu7x:2x2x1
jax: 0.10.0
libtpu: 0.0.40
codegen_flags: <defaults>
</compile_context>

<pallas_src>
import numpy as np
import jax
import jax.numpy as jnp
from jax.experimental import pallas as pl
from jax.experimental.pallas import tpu as pltpu

# Feature-dim segment boundaries (start, end) — see module forward().
SEG_BOUNDS = (
    (0, 3),      # transl
    (3, 66),     # pos_body
    (66, 156),   # pos_hand
    (156, 222),  # vel_body  (156 + 22*3)
    (222, 312),  # vel_hand  (156 + 52*3)
    (312, 444),  # rot_body  (+ 22*6)
    (444, 624),  # rot_hand  (everything up to -4)
    (624, 628),  # feet contact (last 4)
)
D_TOTAL = 628

SEG_NAMES = (
    "transl_loss", "pos_body_loss", "pos_hand_loss", "vel_body_loss",
    "vel_hand_loss", "rot_body_loss", "rot_hand_loss", "feet_contact_loss",
)

_MAX_TILE_ROWS = 1024  # ~2.5 MiB per f32 input block; ~10 MiB double-buffered.


def _round_up(x, m):
    return (x + m - 1) // m * m


def _colsum_kernel(gt_ref, rec_ref, out_ref):
    """Per-block partial column sums of (gt - rec)^2.

    gt_ref, rec_ref : (TILE_N, 628) VMEM blocks (any float dtype)
    out_ref         : (1, 8, 628) f32 VMEM block — sublane row 0 holds the
                      column sums, rows 1..7 are zero (kept only so the store
                      is a full sublane-aligned (8, 628) write).
    """
    diff = gt_ref[...].astype(jnp.float32) - rec_ref[...].astype(jnp.float32)
    colsum = jnp.sum(diff * diff, axis=0, keepdims=True)          # (1, 628)
    row = jax.lax.broadcasted_iota(jnp.int32, (8, D_TOTAL), 0)
    out_ref[0] = jnp.where(row == 0, colsum, jnp.float32(0.0))    # (8, 628)


def _partial_colsums(gt2d, rec2d):
    """Per-block partial column sums of squared error -> (num_blocks, 8, 628) f32."""
    n_rows = gt2d.shape[0]
    tile_n = min(_MAX_TILE_ROWS, _round_up(max(n_rows, 1), 8))
    pad = (-n_rows) % tile_n
    if pad:
        # Zero rows contribute zero squared error; the denominator uses n_rows.
        gt2d = jnp.pad(gt2d, ((0, pad), (0, 0)))
        rec2d = jnp.pad(rec2d, ((0, pad), (0, 0)))
    n_padded = n_rows + pad
    num_blocks = n_padded // tile_n

    itemsize = jnp.dtype(gt2d.dtype).itemsize
    cost = pl.CostEstimate(
        flops=3 * n_padded * D_TOTAL,
        transcendentals=0,
        bytes_accessed=2 * n_padded * D_TOTAL * itemsize
        + num_blocks * 8 * D_TOTAL * 4,
    )

    return pl.pallas_call(
        _colsum_kernel,
        out_shape=jax.ShapeDtypeStruct((num_blocks, 8, D_TOTAL), jnp.float32),
        grid=(num_blocks,),
        in_specs=[
            pl.BlockSpec((tile_n, D_TOTAL), lambda i: (i, 0)),
            pl.BlockSpec((tile_n, D_TOTAL), lambda i: (i, 0)),
        ],
        out_specs=pl.BlockSpec((1, 8, D_TOTAL), lambda i: (i, 0, 0)),
        compiler_params=pltpu.CompilerParams(
            dimension_semantics=("parallel",),
            vmem_limit_bytes=32 * 1024 * 1024,
        ),
        cost_estimate=cost,
    )(gt2d, rec2d)


def _projection_matrix(weights, n_rows):
    """Static (8, 628) matrix folding segment one-hot, width and 1/N into one matvec."""
    proj = np.zeros((len(SEG_BOUNDS), D_TOTAL), dtype=np.float32)
    for i, ((s, e), w) in enumerate(zip(SEG_BOUNDS, weights)):
        proj[i, s:e] = float(w) / (float(e - s) * float(n_rows))
    return jnp.asarray(proj)


def interhuman_wholebody_loss(
    gt,
    recons,
    commit_loss,
    *,
    pos_body=1.5,
    pos_hand=1.5,
    root=1.0,
    feet=1.0,
    rot_body=1.0,
    rot_hand=1.0,
    vel_body=1.0,
    vel_hand=1.0,
    commit=0.02,
):
    """JAX/Pallas equivalent of InterHumanWholeBodyLoss.forward (recons_type='l2').

    gt, recons: (..., 628) float arrays; commit_loss: scalar.
    Returns a dict of scalar losses with the same keys as the PyTorch module.
    """
    assert gt.shape == recons.shape
    assert gt.shape[-1] == D_TOTAL
    n_rows = 1
    for s in gt.shape[:-1]:
        n_rows *= s
    gt2d = gt.reshape(n_rows, D_TOTAL)
    rec2d = recons.reshape(n_rows, D_TOTAL)

    # Stream in the native float dtype (bf16 halves HBM bytes on v6e/v7x);
    # the kernel upcasts per tile.  Non-float inputs are cast once here.
    if not jnp.issubdtype(gt2d.dtype, jnp.floating):
        gt2d = gt2d.astype(jnp.float32)
    if not jnp.issubdtype(rec2d.dtype, jnp.floating):
        rec2d = rec2d.astype(jnp.float32)

    partials = _partial_colsums(gt2d, rec2d)        # (num_blocks, 8, 628) f32
    colsum = jnp.sum(partials, axis=(0, 1))         # (628,)

    # Tiny final segment reduction: one (8, 628) @ (628,) matvec with weights,
    # segment widths and 1/N already folded into the static matrix.
    weights = (root, pos_body, pos_hand, vel_body, vel_hand,
               rot_body, rot_hand, feet)
    weighted = _projection_matrix(weights, n_rows) @ colsum   # (8,)

    loss_dict = {name: weighted[i] for i, name in enumerate(SEG_NAMES)}
    loss_dict["commit_loss"] = jnp.float32(commit) * jnp.asarray(
        commit_loss, jnp.float32)
    return loss_dict


def _reference(gt, recons, commit_loss, **kw):
    """Pure-jnp reference for validation."""
    defaults = dict(pos_body=1.5, pos_hand=1.5, root=1.0, feet=1.0,
                    rot_body=1.0, rot_hand=1.0, vel_body=1.0, vel_hand=1.0,
                    commit=0.02)
    defaults.update(kw)
    w = [defaults["root"], defaults["pos_body"], defaults["pos_hand"],
         defaults["vel_body"], defaults["vel_hand"], defaults["rot_body"],
         defaults["rot_hand"], defaults["feet"]]
    out = {}
    gt = gt.astype(jnp.float32)
    recons = recons.astype(jnp.float32)
    for wi, name, (s, e) in zip(w, SEG_NAMES, SEG_BOUNDS):
        out[name] = wi * jnp.mean((gt[..., s:e] - recons[..., s:e]) ** 2)
    out["commit_loss"] = defaults["commit"] * commit_loss
    return out


if __name__ == "__main__":
    key = jax.random.PRNGKey(0)
    k1, k2, k3 = jax.random.split(key, 3)
    B, T = 2, 8
    gt = jax.random.normal(k1, (B, T, D_TOTAL), dtype=jnp.float32)
    recons = jax.random.normal(k2, (B, T, D_TOTAL), dtype=jnp.float32)
    commit_loss = jax.random.uniform(k3, (), dtype=jnp.float32)

    loss_fn = jax.jit(interhuman_wholebody_loss)
    losses = loss_fn(gt, recons, commit_loss)
    losses = {k: jax.block_until_ready(v) for k, v in losses.items()}

    ref = _reference(gt, recons, commit_loss)
    for k in losses:
        assert jnp.allclose(losses[k], ref[k], rtol=1e-5, atol=1e-6), (
            k, losses[k], ref[k])

    print("KERNEL_OK")
</pallas_src>

<mosaic_0001>
module attributes {stable_mosaic.version = 11 : i64} {
  func.func @_colsum_kernel(%arg0: i32, %arg1: memref<16x628xf32, #tpu.memory_space<vmem>>, %arg2: memref<16x628xf32, #tpu.memory_space<vmem>>, %arg3: memref<1x8x628xf32, #tpu.memory_space<vmem>>) attributes {dimension_semantics = [#tpu.dimension_semantics<parallel>], iteration_bounds = array<i64: 1>, scalar_prefetch = 0 : i64, scratch_operands = 0 : i64, tpu.core_type = #tpu.core_type<tc>, window_params = [{transform_indices = @transform_0, window_bounds = array<i64: 16, 628>}, {transform_indices = @transform_1, window_bounds = array<i64: 16, 628>}, {transform_indices = @transform_2, window_bounds = array<i64: 1, 8, 628>}]} {
    %c0 = arith.constant 0 : index
    %c0_0 = arith.constant 0 : index
    %0 = vector.load %arg1[%c0, %c0_0] : memref<16x628xf32, #tpu.memory_space<vmem>>, vector<16x628xf32>
    %c0_1 = arith.constant 0 : index
    %c0_2 = arith.constant 0 : index
    %1 = vector.load %arg2[%c0_1, %c0_2] : memref<16x628xf32, #tpu.memory_space<vmem>>, vector<16x628xf32>
    %2 = arith.subf %0, %1 : vector<16x628xf32>
    %3 = arith.mulf %2, %2 : vector<16x628xf32>
    %cst = arith.constant dense<0.000000e+00> : vector<628xf32>
    %4 = vector.multi_reduction <add>, %3, %cst [0] : vector<16x628xf32> to vector<628xf32>
    %5 = vector.shape_cast %4 : vector<628xf32> to vector<1x628xf32>
    %6 = tpu.iota {dimensions = array<i32: 0>} : vector<8x628xi32>
    %c0_i32 = arith.constant 0 : i32
    %7 = vector.broadcast %c0_i32 : i32 to vector<8x628xi32>
    %8 = arith.cmpi eq, %6, %7 : vector<8x628xi32>
    %cst_3 = arith.constant 0.000000e+00 : f32
    %9 = vector.shape_cast %5 : vector<1x628xf32> to vector<1x628xf32>
    %10 = vector.broadcast %9 : vector<1x628xf32> to vector<8x628xf32>
    %11 = vector.broadcast %cst_3 : f32 to vector<8x628xf32>
    %12 = arith.select %8, %10, %11 : vector<8x628xi1>, vector<8x628xf32>
    %c0_4 = arith.constant 0 : index
    %c0_5 = arith.constant 0 : index
    %c0_6 = arith.constant 0 : index
    %13 = vector.load %arg3[%c0_4, %c0_5, %c0_6] : memref<1x8x628xf32, #tpu.memory_space<vmem>>, vector<1x8x628xf32>
    %14 = vector.shape_cast %13 : vector<1x8x628xf32> to vector<8x628xf32>
    %15 = vector.shape_cast %12 : vector<8x628xf32> to vector<1x8x628xf32>
    tpu.vector_store %arg3[%c0_4, %c0_5, %c0_6], %15 {strides = array<i32>} : memref<1x8x628xf32, #tpu.memory_space<vmem>>, vector<1x8x628xf32>,
    return
  }
  func.func @transform_0(%arg0: i32) -> (i32, i32) {
    %c0_i32 = arith.constant 0 : i32
    %c0_i32_0 = arith.constant 0 : i32
    return %arg0, %c0_i32 : i32, i32
  }
  func.func @transform_1(%arg0: i32) -> (i32, i32) {
    %c0_i32 = arith.constant 0 : i32
    %c0_i32_0 = arith.constant 0 : i32
    return %arg0, %c0_i32 : i32, i32
  }
  func.func @transform_2(%arg0: i32) -> (i32, i32, i32) {
    %c0_i32 = arith.constant 0 : i32
    %c0_i32_0 = arith.constant 0 : i32
    %c0_i32_1 = arith.constant 0 : i32
    return %arg0, %c0_i32, %c0_i32_0 : i32, i32, i32
  }
}

</mosaic_0001>

<llo_original>
// kernel: interhuman_wholebody_loss.1
$region0: #{interhuman_wholebody_loss.1}
  #allocation0 [shape = 'u32[]', space=smem, size = 0x4, offset = 0x4, fixed_abs, tag = 'smem constant byte address 0x4 - core index']
  #allocation1 [shape = 'u32[144,128]{1,0:T(1,128)}', space=vmem, size = 0x12000, scoped, tag = 'internal scratch']
  %s0 = inlined_call_operand.hbm [shape: f32[16,628], index: 0, kind: input, shape index: {}]
  %s1 = inlined_call_operand.hbm [shape: f32[16,628], index: 1, kind: input, shape index: {}]
  %s2 = inlined_call_operand.vmem [shape: f32[1,8,628], index: 2, kind: output, shape index: {}]
  %s3 = sld [smem:[#allocation0]]
  $region26: #{interhuman_wholebody_loss.1} parent=0
    _
  %s5 = ssub.s32 1, %s3
  %s6 = scalar_select 0, %s5, %s3
  $region1: #{interhuman_wholebody_loss.1} parent=0
    #allocation2 [shape = 'u8[40960]{0}', space=vmem, size = 0xa000, scoped, tag = 'input window, operand 0, single buffered']
    #allocation3 [shape = 's32[1]{0}', space=sflag, size = 0x4, scoped, tag = 'scoped memory for interhuman_wholebody_loss.1']
    #allocation4 [shape = 'u8[40960]{0}', space=vmem, size = 0xa000, scoped, tag = 'input window, operand 1, single buffered']
    #allocation5 [shape = 's32[1]{0}', space=sflag, size = 0x4, scoped, tag = 'scoped memory for interhuman_wholebody_loss.1']
    %7 = vsyncpa [#allocation3], 0
    %8 = vsyncpa [#allocation5], 0
    // Predicated region
    $region2: #{interhuman_wholebody_loss.1} parent=1 // pred_check
      _
    $region3: #{interhuman_wholebody_loss.1} parent=1 // pred_check_branch
      %10 = sbr.rel (0) target = $region5
    $region4: #{interhuman_wholebody_loss.1} parent=1 // pred_region
      %s12 = ssub.s32 1280, 1280
      %13 = vsyncadd [#allocation3], %s12
      %s14 = sshll.u32 [#allocation2], 4
      %s15 = int_to_ptr.vmem [resolvable:$true] %s14
      %20 = dma.hbm_to_vmem [thread:$0]  %s0, 1280, %s15, [#allocation3], 640, 640, 40
    $region5: #{interhuman_wholebody_loss.1} parent=1 // pred_fallthru
      _
    // Predicated region
    $region6: #{interhuman_wholebody_loss.1} parent=1 // pred_check
      _
    $region7: #{interhuman_wholebody_loss.1} parent=1 // pred_check_branch
      %22 = sbr.rel (0) target = $region9
    $region8: #{interhuman_wholebody_loss.1} parent=1 // pred_region
      %s24 = ssub.s32 1280, 1280
      %25 = vsyncadd [#allocation5], %s24
      %s26 = sshll.u32 [#allocation4], 4
      %s27 = int_to_ptr.vmem [resolvable:$true] %s26
      %32 = dma.hbm_to_vmem [thread:$0]  %s1, 1280, %s27, [#allocation5], 640, 640, 40
    $region9: #{interhuman_wholebody_loss.1} parent=1 // pred_fallthru
      _
    // Predicated region
    $region10: #{interhuman_wholebody_loss.1} parent=1 // pred_check
      _
    $region11: #{interhuman_wholebody_loss.1} parent=1 // pred_check_branch
      %34 = sbr.rel (0) target = $region13
    $region12: #{interhuman_wholebody_loss.1} parent=1 // pred_region
      %35 = dma.done [#allocation3], 1280
    $region13: #{interhuman_wholebody_loss.1} parent=1 // pred_fallthru
      _
    // Predicated region
    $region14: #{interhuman_wholebody_loss.1} parent=1 // pred_check
      _
    $region15: #{interhuman_wholebody_loss.1} parent=1 // pred_check_branch
      %37 = sbr.rel (0) target = $region17
    $region16: #{interhuman_wholebody_loss.1} parent=1 // pred_region
      %38 = dma.done [#allocation5], 1280
    $region17: #{interhuman_wholebody_loss.1} parent=1 // pred_fallthru
      _
    %v39 = vld [vmem:[#allocation2] sm:$0xff]
    %v40 = vld [vmem:[#allocation2 + $0x8] sm:$0xff]
    %v41 = vld [vmem:[#allocation2 + $0x10] sm:$0xff]
    %v42 = vld [vmem:[#allocation2 + $0x18] sm:$0xff]
    %v43 = vld [vmem:[#allocation2 + $0x20] sm:$0xff]
    %v44 = vld [vmem:[#allocation2 + $0x28] sm:$0xff]
    %v45 = vld [vmem:[#allocation2 + $0x30] sm:$0xff]
    %v46 = vld [vmem:[#allocation2 + $0x38] sm:$0xff]
    %v47 = vld [vmem:[#allocation2 + $0x40] sm:$0xff]
    %v48 = vld [vmem:[#allocation2 + $0x48] sm:$0xff]
    %v49 = vld [vmem:[#allocation4] sm:$0xff]
    %v50 = vld [vmem:[#allocation4 + $0x8] sm:$0xff]
    %v51 = vld [vmem:[#allocation4 + $0x10] sm:$0xff]
    %v52 = vld [vmem:[#allocation4 + $0x18] sm:$0xff]
    %v53 = vld [vmem:[#allocation4 + $0x20] sm:$0xff]
    %v54 = vld [vmem:[#allocation4 + $0x28] sm:$0xff]
    %v55 = vld [vmem:[#allocation4 + $0x30] sm:$0xff]
    %v56 = vld [vmem:[#allocation4 + $0x38] sm:$0xff]
    %v57 = vld [vmem:[#allocation4 + $0x40] sm:$0xff]
    %v58 = vld [vmem:[#allocation4 + $0x48] sm:$0xff]
    %v59 = vsub.f32 %v39, %v49
    %v60 = vsub.f32 %v40, %v50
    %v61 = vsub.f32 %v41, %v51
    %v62 = vsub.f32 %v42, %v52
    %v63 = vsub.f32 %v43, %v53
    %v64 = vsub.f32 %v44, %v54
    %v65 = vsub.f32 %v45, %v55
    %v66 = vsub.f32 %v46, %v56
    %v67 = vsub.f32 %v47, %v57
    %v68 = vsub.f32 %v48, %v58
    %v69 = vmul.f32 %v59, %v59
    %v70 = vmul.f32 %v60, %v60
    %v71 = vmul.f32 %v61, %v61
    %v72 = vmul.f32 %v62, %v62
    %v73 = vmul.f32 %v63, %v63
    %v74 = vmul.f32 %v64, %v64
    %v75 = vmul.f32 %v65, %v65
    %v76 = vmul.f32 %v66, %v66
    %v77 = vmul.f32 %v67, %v67
    %v78 = vmul.f32 %v68, %v68
    %v79 = vadd.f32 %v69, %v74
    %v80 = vrot.slane %v79, 4
    %v81 = vadd.f32 %v79, %v80
    %v82 = vrot.slane %v81, 2
    %v83 = vadd.f32 %v81, %v82
    %v84 = vrot.slane %v83, 1
    %v85 = vadd.f32 %v83, %v84
    %v86 = vadd.f32 %v70, %v75
    %v87 = vrot.slane %v86, 4
    %v88 = vadd.f32 %v86, %v87
    %v89 = vrot.slane %v88, 2
    %v90 = vadd.f32 %v88, %v89
    %v91 = vrot.slane %v90, 1
    %v92 = vadd.f32 %v90, %v91
    %v93 = vadd.f32 %v71, %v76
    %v94 = vrot.slane %v93, 4
    %v95 = vadd.f32 %v93, %v94
    %v96 = vrot.slane %v95, 2
    %v97 = vadd.f32 %v95, %v96
    %v98 = vrot.slane %v97, 1
    %v99 = vadd.f32 %v97, %v98
    %v100 = vadd.f32 %v72, %v77
    %v101 = vrot.slane %v100, 4
    %v102 = vadd.f32 %v100, %v101
    %v103 = vrot.slane %v102, 2
    %v104 = vadd.f32 %v102, %v103
    %v105 = vrot.slane %v104, 1
    %v106 = vadd.f32 %v104, %v105
    %vm107 = vcmask 949248
    %v108 = vsel %vm107, %v73, 0.0
    %v109 = vsel %vm107, %v78, 0.0
    %v110 = vadd.f32 %v108, %v109
    %v111 = vrot.slane %v110, 4
    %v112 = vadd.f32 %v110, %v111
    %v113 = vrot.slane %v112, 2
    %v114 = vadd.f32 %v112, %v113
    %v115 = vrot.slane %v114, 1
    %v116 = vadd.f32 %v114, %v115
    %v117 = vlaneseq
    %v118 = vshrl.u32 %v117, 7
    %vm119 = vcmp.eq.s32.totalorder %v118, 0
    %v120 = vsel %vm119, %v85, 0.0
    %v121 = vsel %vm119, %v92, 0.0
    %v122 = vsel %vm119, %v99, 0.0
    %v123 = vsel %vm119, %v106, 0.0
    %v124 = vsel %vm119, %v116, 0.0
    %125 = vst [vmem:[%s2] sm:$0xff] %v120
    %126 = vst [vmem:[%s2 + $0x8] sm:$0xff] %v121
    %127 = vst [vmem:[%s2 + $0x10] sm:$0xff] %v122
    %128 = vst [vmem:[%s2 + $0x18] sm:$0xff] %v123
    %129 = vst.msk [vmem:[%s2 + $0x20] sm:$0xff] %vm107, %v124
    // Predicated region
    $region18: #{interhuman_wholebody_loss.1} parent=1 // pred_check
      _
    $region19: #{interhuman_wholebody_loss.1} parent=1 // pred_check_branch
      %131 = sbr.rel (0) target = $region21
    $region20: #{interhuman_wholebody_loss.1} parent=1 // pred_region
      _
    $region21: #{interhuman_wholebody_loss.1} parent=1 // pred_fallthru
      _
    // Predicated region
    $region22: #{interhuman_wholebody_loss.1} parent=1 // pred_check
      _
    $region23: #{interhuman_wholebody_loss.1} parent=1 // pred_check_branch
      %133 = sbr.rel (0) target = $region25
    $region24: #{interhuman_wholebody_loss.1} parent=1 // pred_region
      _
    $region25: #{interhuman_wholebody_loss.1} parent=1 // pred_fallthru
      _
    %134 = vsyncpa [#allocation3], 1
    %135 = vsyncpa [#allocation5], 1

</llo_original>
